<compile_context>
chip_gen: v7x
topology: tpu7x:2x2x1
jax: 0.10.0
libtpu: 0.0.40
codegen_flags: <defaults>
</compile_context>

<pallas_src>
import numpy as np

import jax
import jax.numpy as jnp
from jax.experimental import pallas as pl
from jax.experimental.pallas import tpu as pltpu


# ---------------------------------------------------------------------------
# Kernel: one (batch, HW-tile) block of the local branch + gating epilogue.
# ---------------------------------------------------------------------------
def _aff_kernel(x_ref, r_ref, bg_ref, w1_ref, b1_ref, w2_ref, o_ref):
    # Blocks: x/r/o -> [1, C, T] (HW tile on the lane axis), bg -> [1, C, 1].
    x = x_ref[0].astype(jnp.float32)          # [C, T]
    res = r_ref[0].astype(jnp.float32)        # [C, T]
    xa = x + res

    # Local branch: 1x1 conv (+folded BN) -> ReLU -> 1x1 conv (+folded BN).
    xa_lp = xa.astype(w1_ref.dtype)           # bf16 MXU operands, f32 accumulate
    h = jnp.dot(w1_ref[...], xa_lp, preferred_element_type=jnp.float32) + b1_ref[...]
    h = jnp.maximum(h, 0.0)
    xl = jnp.dot(w2_ref[...], h.astype(w2_ref.dtype),
                 preferred_element_type=jnp.float32)                      # [C, T]

    # bg = conv2 bias + precomputed global branch, folded into one [C, 1] bias.
    xlg = xl + bg_ref[0]
    wei = pl.reciprocal(1.0 + jnp.exp(-xlg), approx=True)                 # EUP slots
    o_ref[0] = (2.0 * (res + wei * (x - res))).astype(o_ref.dtype)


# ---------------------------------------------------------------------------
# Tile / VMEM selection (generation-aware).
# ---------------------------------------------------------------------------
def _round_up(a, m):
    return (a + m - 1) // m * m


def _vmem_limit_bytes():
    try:
        cap = pltpu.get_tpu_info().vmem_capacity_bytes   # 64 MiB v7x, 128 MiB v5e/v6e
    except Exception:
        cap = 64 * 1024 * 1024                           # conservative fallback
    return min(cap * 3 // 4, 100 * 1024 * 1024)


def _pick_hw_tile(hw, c, i, in_bytes, out_bytes, batch, vmem_limit):
    """Largest lane-dense HW tile that fits the VMEM budget, with enough grid steps."""
    budget = vmem_limit // 2
    hw_ceil = _round_up(hw, 128)
    t = 128
    for cand in (128, 256, 512, 1024, 2048, 4096, 8192, 16384):
        if cand > hw_ceil:
            break
        need = 2 * c * cand * (2 * in_bytes + out_bytes)      # double-buffered x/r/o
        need += (4 * c + 2 * i) * cand * 4                    # f32 in-kernel temporaries
        if need <= budget:
            t = cand
    # Keep >= 4 grid steps when possible: pipeline depth + both v7x TensorCores.
    while t > 128 and batch * pl.cdiv(hw, t) < 4:
        t //= 2
    return t


# ---------------------------------------------------------------------------
# Wrapper: NCHW in / NCHW out, no transposes, no pad/slice round-trips.
# ---------------------------------------------------------------------------
def aff_pallas(x_nchw, res_nchw, params, *, compute_dtype=jnp.bfloat16):
    """x, residual: [B, C, H, W]. Returns [B, C, H, W] in the input dtype."""
    B, C, H, W = x_nchw.shape
    HW = H * W
    (w1l, b1l, w2l, b2l, w1g, b1g, w2g, b2g) = params    # weights [out, in], biases [out]
    I = w1l.shape[0]
    out_dtype = x_nchw.dtype

    # Free reshape (contiguous dims) -> [B, C, HW]; HW sits on the lane axis.
    x = x_nchw.reshape(B, C, HW)
    r = res_nchw.reshape(B, C, HW)

    # ---- Global branch hoisted out of the kernel (tiny [B, C] work).
    # Single fused read of x/r with f32 accumulation for the full-HW mean.
    ga = jnp.mean(x.astype(jnp.float32) + r.astype(jnp.float32), axis=2)          # [B, C]
    hg = jnp.maximum(
        jnp.einsum('ic,bc->bi', w1g, ga, precision='highest') + b1g, 0.0)          # [B, I]
    xg = jnp.einsum('ci,bi->bc', w2g, hg, precision='highest') + b2g               # [B, C]
    # Fold the local conv2 bias and the global branch into one per-batch bias.
    bg = (xg + b2l[None, :]).astype(jnp.float32)[:, :, None]                       # [B, C, 1]

    # ---- Low-precision kernel operands (no-op casts if already compute_dtype).
    x_lp = x.astype(compute_dtype)
    r_lp = r.astype(compute_dtype)
    w1 = w1l.astype(compute_dtype)
    w2 = w2l.astype(compute_dtype)
    b1 = b1l.astype(jnp.float32).reshape(I, 1)

    vmem_limit = _vmem_limit_bytes()
    in_bytes = np.dtype(compute_dtype).itemsize
    out_bytes = np.dtype(out_dtype).itemsize
    T = _pick_hw_tile(HW, C, I, in_bytes, out_bytes, B, vmem_limit)
    n_hw = pl.cdiv(HW, T)   # ragged tail handled by Pallas block masking

    full = lambda shape: pl.BlockSpec(shape, lambda b, t: (0,) * len(shape))
    out = pl.pallas_call(
        _aff_kernel,
        out_shape=jax.ShapeDtypeStruct((B, C, HW), out_dtype),
        grid_spec=pltpu.PrefetchScalarGridSpec(
            num_scalar_prefetch=0,
            grid=(B, n_hw),
            in_specs=[
                pl.BlockSpec((1, C, T), lambda b, t: (b, 0, t)),   # x tile
                pl.BlockSpec((1, C, T), lambda b, t: (b, 0, t)),   # residual tile
                pl.BlockSpec((1, C, 1), lambda b, t: (b, 0, 0)),   # bg = b2 + global branch
                full((I, C)), full((I, 1)),                        # local conv1 (+BN)
                full((C, I)),                                      # local conv2 (+BN), bias folded
            ],
            out_specs=pl.BlockSpec((1, C, T), lambda b, t: (b, 0, t)),
        ),
        compiler_params=pltpu.CompilerParams(
            dimension_semantics=("parallel", "parallel"),
            vmem_limit_bytes=vmem_limit),
    )(x_lp, r_lp, bg, w1, b1, w2)

    return out.reshape(B, C, H, W)


# ---------------------------------------------------------------------------
# Parameters (conv weights [out, in] + inference-mode BN folded in).
# ---------------------------------------------------------------------------
def _fold_bn(w, b, gamma, beta, mean, var, eps=1e-5):
    """Fold eval-mode BatchNorm into a [C_out, C_in] weight + [C_out] bias."""
    scale = gamma / jnp.sqrt(var + eps)             # [C_out]
    return w * scale[:, None], (b - mean) * scale + beta


def make_params(key, channels, r):
    inter = channels // r
    keys = jax.random.split(key, 12)

    def conv_w(k, cout, cin):
        return jax.random.normal(k, (cout, cin), jnp.float32) * 0.1

    def bn_stats(k, c):
        k1, k2, k3 = jax.random.split(k, 3)
        gamma = 1.0 + 0.1 * jax.random.normal(k1, (c,), jnp.float32)
        beta = 0.1 * jax.random.normal(k2, (c,), jnp.float32)
        mean = 0.1 * jax.random.normal(k3, (c,), jnp.float32)
        var = jnp.ones((c,), jnp.float32)
        return gamma, beta, mean, var

    w1l, b1l = _fold_bn(conv_w(keys[0], inter, channels),
                        0.1 * jax.random.normal(keys[1], (inter,), jnp.float32),
                        *bn_stats(keys[2], inter))
    w2l, b2l = _fold_bn(conv_w(keys[3], channels, inter),
                        0.1 * jax.random.normal(keys[4], (channels,), jnp.float32),
                        *bn_stats(keys[5], channels))
    w1g, b1g = _fold_bn(conv_w(keys[6], inter, channels),
                        0.1 * jax.random.normal(keys[7], (inter,), jnp.float32),
                        *bn_stats(keys[8], inter))
    w2g, b2g = _fold_bn(conv_w(keys[9], channels, inter),
                        0.1 * jax.random.normal(keys[10], (channels,), jnp.float32),
                        *bn_stats(keys[11], channels))
    return (w1l, b1l, w2l, b2l, w1g, b1g, w2g, b2g)


# ---------------------------------------------------------------------------
# Pure-JAX f32 reference (eval-mode forward), NCHW in/out.
# ---------------------------------------------------------------------------
def aff_reference(x, res, params):
    (w1l, b1l, w2l, b2l, w1g, b1g, w2g, b2g) = params

    def conv1x1(z, w, b):   # z: [B, Cin, H, W], w: [Cout, Cin], b: [Cout]
        return (jnp.einsum('oc,bchw->bohw', w, z, precision='highest')
                + b[None, :, None, None])

    xa = x + res
    xl = conv1x1(jnp.maximum(conv1x1(xa, w1l, b1l), 0.0), w2l, b2l)
    ga = jnp.mean(xa, axis=(2, 3), keepdims=True)
    xg = conv1x1(jnp.maximum(conv1x1(ga, w1g, b1g), 0.0), w2g, b2g)
    wei = jax.nn.sigmoid(xl + xg)
    return 2.0 * x * wei + 2.0 * res * (1.0 - wei)


if __name__ == "__main__":
    channels, r = 64, 4            # module defaults -> inter_channels = 16
    key = jax.random.PRNGKey(0)
    kx, kr, kp = jax.random.split(key, 3)
    params = make_params(kp, channels, r)

    aff_jit = jax.jit(aff_pallas)

    # 16x16 exercises the aligned path; 14x14 (HW=196) exercises the ragged
    # (non-multiple-of-128) tail handled in-kernel via grid masking.
    for (B, H, W) in ((2, 16, 16), (2, 14, 14)):
        kxi = jax.random.fold_in(kx, H)
        kri = jax.random.fold_in(kr, H)
        x = jax.random.normal(kxi, (B, channels, H, W), jnp.float32).astype(jnp.bfloat16)
        residual = jax.random.normal(kri, (B, channels, H, W), jnp.float32).astype(jnp.bfloat16)

        out = jax.block_until_ready(aff_jit(x, residual, params))
        assert out.shape == (B, channels, H, W)
        assert out.dtype == jnp.bfloat16

        ref = aff_reference(x.astype(jnp.float32), residual.astype(jnp.float32), params)
        ok = jnp.allclose(out.astype(jnp.float32), ref, atol=1.2e-1, rtol=3e-2)
        assert bool(ok), f"mismatch vs reference at shape {(B, channels, H, W)}"

    print("KERNEL_OK")
</pallas_src>

<mosaic_0001>
module attributes {stable_mosaic.version = 11 : i64} {
  func.func @_aff_kernel(%arg0: i32, %arg1: i32, %arg2: memref<1x64x128xbf16, #tpu.memory_space<vmem>>, %arg3: memref<1x64x128xbf16, #tpu.memory_space<vmem>>, %arg4: memref<1x64x1xf32, #tpu.memory_space<vmem>>, %arg5: memref<16x64xbf16, #tpu.memory_space<vmem>>, %arg6: memref<16x1xf32, #tpu.memory_space<vmem>>, %arg7: memref<64x16xbf16, #tpu.memory_space<vmem>>, %arg8: memref<1x64x128xbf16, #tpu.memory_space<vmem>>) attributes {dimension_semantics = [#tpu.dimension_semantics<parallel>, #tpu.dimension_semantics<parallel>], iteration_bounds = array<i64: 2, 2>, scalar_prefetch = 0 : i64, scratch_operands = 0 : i64, tpu.core_type = #tpu.core_type<tc>, window_params = [{transform_indices = @transform_0, window_bounds = array<i64: 1, 64, 128>}, {transform_indices = @transform_1, window_bounds = array<i64: 1, 64, 128>}, {transform_indices = @transform_2, window_bounds = array<i64: 1, 64, 1>}, {pipeline_mode = #tpu.pipeline_mode<synchronous>, transform_indices = @transform_3, window_bounds = array<i64: 16, 64>}, {pipeline_mode = #tpu.pipeline_mode<synchronous>, transform_indices = @transform_4, window_bounds = array<i64: 16, 1>}, {pipeline_mode = #tpu.pipeline_mode<synchronous>, transform_indices = @transform_5, window_bounds = array<i64: 64, 16>}, {transform_indices = @transform_6, window_bounds = array<i64: 1, 64, 128>}]} {
    %c0 = arith.constant 0 : index
    %c0_0 = arith.constant 0 : index
    %c0_1 = arith.constant 0 : index
    %0 = vector.load %arg2[%c0, %c0_0, %c0_1] : memref<1x64x128xbf16, #tpu.memory_space<vmem>>, vector<1x64x128xbf16>
    %1 = vector.shape_cast %0 : vector<1x64x128xbf16> to vector<64x128xbf16>
    %2 = arith.extf %1 : vector<64x128xbf16> to vector<64x128xf32>
    %c0_2 = arith.constant 0 : index
    %c0_3 = arith.constant 0 : index
    %c0_4 = arith.constant 0 : index
    %3 = vector.load %arg3[%c0_2, %c0_3, %c0_4] : memref<1x64x128xbf16, #tpu.memory_space<vmem>>, vector<1x64x128xbf16>
    %4 = vector.shape_cast %3 : vector<1x64x128xbf16> to vector<64x128xbf16>
    %5 = arith.extf %4 : vector<64x128xbf16> to vector<64x128xf32>
    %6 = arith.addf %2, %5 : vector<64x128xf32>
    %7 = arith.truncf %6 : vector<64x128xf32> to vector<64x128xbf16>
    %c0_5 = arith.constant 0 : index
    %c0_6 = arith.constant 0 : index
    %8 = vector.load %arg5[%c0_5, %c0_6] : memref<16x64xbf16, #tpu.memory_space<vmem>>, vector<16x64xbf16>
    %cst = arith.constant dense<0.000000e+00> : vector<16x128xf32>
    %9 = tpu.matmul %8, %7, %cst {dimension_numbers = #tpu.dot_dimension_numbers<[1], [0], [0], [1], [0, 0, 1, 1], [], []>} : vector<16x64xbf16>, vector<64x128xbf16>, vector<16x128xf32> -> vector<16x128xf32>
    %c0_7 = arith.constant 0 : index
    %c0_8 = arith.constant 0 : index
    %10 = vector.load %arg6[%c0_7, %c0_8] : memref<16x1xf32, #tpu.memory_space<vmem>>, vector<16x1xf32>
    %11 = vector.broadcast %10 : vector<16x1xf32> to vector<16x128xf32>
    %12 = arith.addf %9, %11 : vector<16x128xf32>
    %cst_9 = arith.constant 0.000000e+00 : f32
    %13 = vector.broadcast %cst_9 : f32 to vector<16x128xf32>
    %14 = arith.maximumf %12, %13 : vector<16x128xf32>
    %c0_10 = arith.constant 0 : index
    %c0_11 = arith.constant 0 : index
    %15 = vector.load %arg7[%c0_10, %c0_11] : memref<64x16xbf16, #tpu.memory_space<vmem>>, vector<64x16xbf16>
    %16 = arith.truncf %14 : vector<16x128xf32> to vector<16x128xbf16>
    %cst_12 = arith.constant dense<0.000000e+00> : vector<64x128xf32>
    %17 = tpu.matmul %15, %16, %cst_12 {dimension_numbers = #tpu.dot_dimension_numbers<[1], [0], [0], [1], [0, 0, 1, 1], [], []>} : vector<64x16xbf16>, vector<16x128xbf16>, vector<64x128xf32> -> vector<64x128xf32>
    %c0_13 = arith.constant 0 : index
    %c0_14 = arith.constant 0 : index
    %c0_15 = arith.constant 0 : index
    %18 = vector.load %arg4[%c0_13, %c0_14, %c0_15] : memref<1x64x1xf32, #tpu.memory_space<vmem>>, vector<1x64x1xf32>
    %19 = vector.shape_cast %18 : vector<1x64x1xf32> to vector<64x1xf32>
    %20 = vector.broadcast %19 : vector<64x1xf32> to vector<64x128xf32>
    %21 = arith.addf %17, %20 : vector<64x128xf32>
    %cst_16 = arith.constant 0.000000e+00 : f32
    %22 = vector.broadcast %cst_16 : f32 to vector<64x128xf32>
    %23 = arith.subf %22, %21 : vector<64x128xf32>
    %24 = math.exp %23 : vector<64x128xf32>
    %cst_17 = arith.constant 1.000000e+00 : f32
    %25 = vector.broadcast %cst_17 : f32 to vector<64x128xf32>
    %26 = arith.addf %25, %24 : vector<64x128xf32>
    %27 = tpu.reciprocal %26 {approx = true} : vector<64x128xf32> -> vector<64x128xf32>
    %28 = arith.subf %2, %5 : vector<64x128xf32>
    %29 = arith.mulf %27, %28 : vector<64x128xf32>
    %30 = arith.addf %5, %29 : vector<64x128xf32>
    %cst_18 = arith.constant 2.000000e+00 : f32
    %31 = vector.broadcast %cst_18 : f32 to vector<64x128xf32>
    %32 = arith.mulf %31, %30 : vector<64x128xf32>
    %33 = arith.truncf %32 : vector<64x128xf32> to vector<64x128xbf16>
    %c0_19 = arith.constant 0 : index
    %c0_20 = arith.constant 0 : index
    %c0_21 = arith.constant 0 : index
    %34 = vector.load %arg8[%c0_19, %c0_20, %c0_21] : memref<1x64x128xbf16, #tpu.memory_space<vmem>>, vector<1x64x128xbf16>
    %35 = vector.shape_cast %34 : vector<1x64x128xbf16> to vector<64x128xbf16>
    %36 = vector.shape_cast %33 : vector<64x128xbf16> to vector<1x64x128xbf16>
    tpu.vector_store %arg8[%c0_19, %c0_20, %c0_21], %36 {strides = array<i32>} : memref<1x64x128xbf16, #tpu.memory_space<vmem>>, vector<1x64x128xbf16>,
    return
  }
  func.func @transform_0(%arg0: i32, %arg1: i32) -> (i32, i32, i32) {
    %c0_i32 = arith.constant 0 : i32
    %c0_i32_0 = arith.constant 0 : i32
    return %arg0, %c0_i32, %arg1 : i32, i32, i32
  }
  func.func @transform_1(%arg0: i32, %arg1: i32) -> (i32, i32, i32) {
    %c0_i32 = arith.constant 0 : i32
    %c0_i32_0 = arith.constant 0 : i32
    return %arg0, %c0_i32, %arg1 : i32, i32, i32
  }
  func.func @transform_2(%arg0: i32, %arg1: i32) -> (i32, i32, i32) {
    %c0_i32 = arith.constant 0 : i32
    %c0_i32_0 = arith.constant 0 : i32
    %c0_i32_1 = arith.constant 0 : i32
    return %arg0, %c0_i32, %c0_i32_0 : i32, i32, i32
  }
  func.func @transform_3(%arg0: i32, %arg1: i32) -> (i32, i32) {
    %c0_i32 = arith.constant 0 : i32
    %c0_i32_0 = arith.constant 0 : i32
    %c0_i32_1 = arith.constant 0 : i32
    return %c0_i32, %c0_i32_0 : i32, i32
  }
  func.func @transform_4(%arg0: i32, %arg1: i32) -> (i32, i32) {
    %c0_i32 = arith.constant 0 : i32
    %c0_i32_0 = arith.constant 0 : i32
    %c0_i32_1 = arith.constant 0 : i32
    return %c0_i32, %c0_i32_0 : i32, i32
  }
  func.func @transform_5(%arg0: i32, %arg1: i32) -> (i32, i32) {
    %c0_i32 = arith.constant 0 : i32
    %c0_i32_0 = arith.constant 0 : i32
    %c0_i32_1 = arith.constant 0 : i32
    return %c0_i32, %c0_i32_0 : i32, i32
  }
  func.func @transform_6(%arg0: i32, %arg1: i32) -> (i32, i32, i32) {
    %c0_i32 = arith.constant 0 : i32
    %c0_i32_0 = arith.constant 0 : i32
    return %arg0, %c0_i32, %arg1 : i32, i32, i32
  }
}

</mosaic_0001>

<llo_original>
// kernel: aff_pallas.1
$region0: #{aff_pallas.1}
  #allocation0 [shape = 'u32[]', space=smem, size = 0x4, offset = 0x4, fixed_abs, tag = 'smem constant byte address 0x4 - core index']
  #allocation1 [shape = 'u32[144,128]{1,0:T(1,128)}', space=vmem, size = 0x12000, scoped, tag = 'internal scratch']
  %s0 = inlined_call_operand.vmem [shape: bf16[2,64,256], index: 0, kind: input, shape index: {}]
  %s1 = inlined_call_operand.vmem [shape: bf16[2,64,256], index: 1, kind: input, shape index: {}]
  %s2 = inlined_call_operand.vmem [shape: f32[2,64,1], index: 2, kind: input, shape index: {}]
  %s3 = inlined_call_operand.vmem [shape: bf16[16,64], index: 3, kind: input, shape index: {}]
  %s4 = inlined_call_operand.vmem [shape: f32[16,1], index: 4, kind: input, shape index: {}]
  %s5 = inlined_call_operand.vmem [shape: bf16[64,16], index: 5, kind: input, shape index: {}]
  %s6 = inlined_call_operand.vmem [shape: bf16[2,64,256], index: 6, kind: output, shape index: {}]
  %s7 = sld [smem:[#allocation0]]
  $region176: #{aff_pallas.1} parent=0
    _
  %s9 = ssub.s32 1, %s7
  %s10 = scalar_select 0, %s9, %s7
  $region1: #{aff_pallas.1} parent=0
    #allocation2 [shape = 'u8[32768]{0}', space=vmem, size = 0x8000, scoped, tag = 'input window, operand 0']
    #allocation3 [shape = 'u8[32768]{0}', space=vmem, size = 0x8000, scoped, tag = 'input window, operand 1']
    #allocation4 [shape = 'u8[32768]{0}', space=vmem, size = 0x8000, scoped, tag = 'output window, operand 0']
    loop: start=0, step=1, limit=6
    $region2: #{aff_pallas.1} parent=1 // loop_pre_header
      _
    $region3: #{aff_pallas.1} parent=1 // loop_header
      %s12 = sphi 0, %s16
      %p13 = scmp.ge.s32.totalorder %s12, 6
      %s19 = sphi 0, %s31
      %s20 = sphi 0, %s27
      %s21 = sphi 0, %s19
      %s22 = sphi 0, %s20
      %s23 = sphi 0, %s21
      %s24 = sphi 0, %s22
      %s36 = sphi 0, %s38
      %s39 = sphi 0, %s36
      %s40 = sphi 0, %s39
      %s56 = sphi 0, %s40
      %s64 = sphi 0, %s66
      %s67 = sphi 0, %s64
      %s68 = sphi 0, %s67
      %s84 = sphi 0, %s68
      %s90 = sphi 0, %s92
      %s93 = sphi 0, %s90
      %s94 = sphi 0, %s93
      %s110 = sphi 0, %s94
      %s114 = sphi 0, %s114
      %s116 = sphi 0, %s114
      %s117 = sphi 0, %s116
      %s131 = sphi 0, %s117
      %s135 = sphi 0, %s135
      %s137 = sphi 0, %s135
      %s138 = sphi 0, %s137
      %s152 = sphi 0, %s138
      %s156 = sphi 0, %s156
      %s158 = sphi 0, %s156
      %s159 = sphi 0, %s158
      %s173 = sphi 0, %s159
      %s181 = sphi 0, %s183
      %s184 = sphi 0, %s181
      %s185 = sphi 0, %s184
      %s201 = sphi 0, %s185
    $region4: #{aff_pallas.1} parent=1 // loop_header_branch
      %15 = sbr.rel (%p13) target = $region8
    $region5: #{aff_pallas.1} parent=1 // loop_body
      %s17 = ssub.s32 %s12, 1
      %s18 = ssub.s32 %s12, 2
      %s25 = sadd.s32 1, %s20
      %p26 = scmp.ge.s32.totalorder %s25, 2
      %s27 = scalar_select %p26, 0, %s25
      %s28 = sadd.s32 1, %s19
      %s29 = scalar_select %p26, %s28, %s19
      %p30 = scmp.ge.s32.totalorder %s29, 2
      %s31 = scalar_select %p30, 0, %s29
      %s32 = ssub.s32 %s19, %s31
      %s33 = ssub.s32 %s20, %s27
      %s34 = sor.u32 %s32, %s33
      %p35 = scmp.eq.s32.totalorder %s34, 0
      %s37 = sadd.s32 %s36, 1
      %s38 = scalar_select %p35, %s36, %s37
      %p41 = pneg %p35
      %p42 = scmp.eq.s32.totalorder %s12, 3
      %p43 = por %p41, %p42
      %p44 = scmp.ne.s32.totalorder %s36, %s39
      %p45 = scmp.eq.s32.totalorder %s12, 0
      %p46 = por %p44, %p45
      %p47 = scmp.ne.s32.totalorder %s36, %s39
      %p48 = scmp.eq.s32.totalorder %s17, 3
      %p49 = por %p47, %p48
      %p50 = scmp.ne.s32.totalorder %s39, %s40
      %p51 = scmp.eq.s32.totalorder %s17, 0
      %p52 = por %p50, %p51
      %p53 = scmp.ne.s32.totalorder %s39, %s40
      %p54 = scmp.eq.s32.totalorder %s18, 3
      %p55 = por %p53, %p54
      %p57 = scmp.ne.s32.totalorder %s40, %s56
      %p58 = scmp.eq.s32.totalorder %s18, 0
      %p59 = por %p57, %p58
      %s60 = ssub.s32 %s19, %s31
      %s61 = ssub.s32 %s20, %s27
      %s62 = sor.u32 %s60, %s61
      %p63 = scmp.eq.s32.totalorder %s62, 0
      %s65 = sadd.s32 %s64, 1
      %s66 = scalar_select %p63, %s64, %s65
      %p69 = pneg %p63
      %p70 = scmp.eq.s32.totalorder %s12, 3
      %p71 = por %p69, %p70
      %p72 = scmp.ne.s32.totalorder %s64, %s67
      %p73 = scmp.eq.s32.totalorder %s12, 0
      %p74 = por %p72, %p73
      %p75 = scmp.ne.s32.totalorder %s64, %s67
      %p76 = scmp.eq.s32.totalorder %s17, 3
      %p77 = por %p75, %p76
      %p78 = scmp.ne.s32.totalorder %s67, %s68
      %p79 = scmp.eq.s32.totalorder %s17, 0
      %p80 = por %p78, %p79
      %p81 = scmp.ne.s32.totalorder %s67, %s68
      %p82 = scmp.eq.s32.totalorder %s18, 3
      %p83 = por %p81, %p82
      %p85 = scmp.ne.s32.totalorder %s68, %s84
      %p86 = scmp.eq.s32.totalorder %s18, 0
      %p87 = por %p85, %p86
      %s88 = ssub.s32 %s19, %s31
      %p89 = scmp.eq.s32.totalorder %s88, 0
      %s91 = sadd.s32 %s90, 1
      %s92 = scalar_select %p89, %s90, %s91
      %p95 = pneg %p89
      %p96 = scmp.eq.s32.totalorder %s12, 3
      %p97 = por %p95, %p96
      %p98 = scmp.ne.s32.totalorder %s90, %s93
      %p99 = scmp.eq.s32.totalorder %s12, 0
      %p100 = por %p98, %p99
      %p101 = scmp.ne.s32.totalorder %s90, %s93
      %p102 = scmp.eq.s32.totalorder %s17, 3
      %p103 = por %p101, %p102
      %p104 = scmp.ne.s32.totalorder %s93, %s94
      %p105 = scmp.eq.s32.totalorder %s17, 0
      %p106 = por %p104, %p105
      %p107 = scmp.ne.s32.totalorder %s93, %s94
      %p108 = scmp.eq.s32.totalorder %s18, 3
      %p109 = por %p107, %p108
      %p111 = scmp.ne.s32.totalorder %s94, %s110
      %p112 = scmp.eq.s32.totalorder %s18, 0
      %p113 = por %p111, %p112
      %s115 = sadd.s32 %s114, 1
      %p118 = scmp.eq.s32.totalorder %s12, 3
      %p119 = scmp.ne.s32.totalorder %s114, %s116
      %p120 = scmp.eq.s32.totalorder %s12, 0
      %p121 = por %p119, %p120
      %p122 = scmp.ne.s32.totalorder %s114, %s116
      %p123 = scmp.eq.s32.totalorder %s17, 3
      %p124 = por %p122, %p123
      %p125 = scmp.ne.s32.totalorder %s116, %s117
      %p126 = scmp.eq.s32.totalorder %s17, 0
      %p127 = por %p125, %p126
      %p128 = scmp.ne.s32.totalorder %s116, %s117
      %p129 = scmp.eq.s32.totalorder %s18, 3
      %p130 = por %p128, %p129
      %p132 = scmp.ne.s32.totalorder %s117, %s131
      %p133 = scmp.eq.s32.totalorder %s18, 0
      %p134 = por %p132, %p133
      %s136 = sadd.s32 %s135, 1
      %p139 = scmp.eq.s32.totalorder %s12, 3
      %p140 = scmp.ne.s32.totalorder %s135, %s137
      %p141 = scmp.eq.s32.totalorder %s12, 0
      %p142 = por %p140, %p141
      %p143 = scmp.ne.s32.totalorder %s135, %s137
      %p144 = scmp.eq.s32.totalorder %s17, 3
      %p145 = por %p143, %p144
      %p146 = scmp.ne.s32.totalorder %s137, %s138
      %p147 = scmp.eq.s32.totalorder %s17, 0
      %p148 = por %p146, %p147
      %p149 = scmp.ne.s32.totalorder %s137, %s138
      %p150 = scmp.eq.s32.totalorder %s18, 3
      %p151 = por %p149, %p150
      %p153 = scmp.ne.s32.totalorder %s138, %s152
      %p154 = scmp.eq.s32.totalorder %s18, 0
      %p155 = por %p153, %p154
      %s157 = sadd.s32 %s156, 1
      %p160 = scmp.eq.s32.totalorder %s12, 3
      %p161 = scmp.ne.s32.totalorder %s156, %s158
      %p162 = scmp.eq.s32.totalorder %s12, 0
      %p163 = por %p161, %p162
      %p164 = scmp.ne.s32.totalorder %s156, %s158
      %p165 = scmp.eq.s32.totalorder %s17, 3
      %p166 = por %p164, %p165
      %p167 = scmp.ne.s32.totalorder %s158, %s159
      %p168 = scmp.eq.s32.totalorder %s17, 0
      %p169 = por %p167, %p168
      %p170 = scmp.ne.s32.totalorder %s158, %s159
      %p171 = scmp.eq.s32.totalorder %s18, 3
      %p172 = por %p170, %p171
      %p174 = scmp.ne.s32.totalorder %s159, %s173
      %p175 = scmp.eq.s32.totalorder %s18, 0
      %p176 = por %p174, %p175
      %s177 = ssub.s32 %s19, %s31
      %s178 = ssub.s32 %s20, %s27
      %s179 = sor.u32 %s177, %s178
      %p180 = scmp.eq.s32.totalorder %s179, 0
      %s182 = sadd.s32 %s181, 1
      %s183 = scalar_select %p180, %s181, %s182
      %p186 = pneg %p180
      %p187 = scmp.eq.s32.totalorder %s12, 3
      %p188 = por %p186, %p187
      %p189 = scmp.ne.s32.totalorder %s181, %s184
      %p190 = scmp.eq.s32.totalorder %s12, 0
      %p191 = por %p189, %p190
      %p192 = scmp.ne.s32.totalorder %s181, %s184
      %p193 = scmp.eq.s32.totalorder %s17, 3
      %p194 = por %p192, %p193
      %p195 = scmp.ne.s32.totalorder %s184, %s185
      %p196 = scmp.eq.s32.totalorder %s17, 0
      %p197 = por %p195, %p196
      %p198 = scmp.ne.s32.totalorder %s184, %s185
      %p199 = scmp.eq.s32.totalorder %s18, 3
      %p200 = por %p198, %p199
      %p202 = scmp.ne.s32.totalorder %s185, %s201
      %p203 = scmp.eq.s32.totalorder %s18, 0
      %p204 = por %p202, %p203
      %p205 = scmp.le.s32.totalorder 1, %s12
      %p206 = scmp.lt.s32.totalorder %s12, 5
      %p207 = pnand %p205, %p206
      %p208 = pneg %p207
      // Predicated region
      $region9: #{aff_pallas.1} parent=5 // pred_check
        _
      $region10: #{aff_pallas.1} parent=5 // pred_check_branch
        %210 = sbr.rel (%p207) target = $region12
      $region11: #{aff_pallas.1} parent=5 // pred_region
        %s211 = ssub.s32 %s12, 1
        // Predicated region
        $region13: #{aff_pallas.1} parent=11 // pred_check
          %p212 = pneg %p127
        $region14: #{aff_pallas.1} parent=11 // pred_check_branch
          %214 = sbr.rel (%p212) target = $region16
        $region15: #{aff_pallas.1} parent=11 // pred_region
          _
        $region16: #{aff_pallas.1} parent=11 // pred_fallthru
          _
        // Predicated region
        $region17: #{aff_pallas.1} parent=11 // pred_check
          %p215 = pneg %p148
        $region18: #{aff_pallas.1} parent=11 // pred_check_branch
          %217 = sbr.rel (%p215) target = $region20
        $region19: #{aff_pallas.1} parent=11 // pred_region
          _
        $region20: #{aff_pallas.1} parent=11 // pred_fallthru
          _
        // Predicated region
        $region21: #{aff_pallas.1} parent=11 // pred_check
          %p218 = pneg %p169
        $region22: #{aff_pallas.1} parent=11 // pred_check_branch
          %220 = sbr.rel (%p218) target = $region24
        $region23: #{aff_pallas.1} parent=11 // pred_region
          _
        $region24: #{aff_pallas.1} parent=11 // pred_fallthru
          _
      $region12: #{aff_pallas.1} parent=5 // pred_fallthru
        _
      %p221 = scmp.lt.s32.totalorder %s12, 4
      // Predicated region
      $region25: #{aff_pallas.1} parent=5 // pred_check
        %p222 = pneg %p221
      $region26: #{aff_pallas.1} parent=5 // pred_check_branch
        %224 = sbr.rel (%p222) target = $region28
      $region27: #{aff_pallas.1} parent=5 // pred_region
        // Predicated region
        $region29: #{aff_pallas.1} parent=27 // pred_check
          %p225 = pneg %p46
        $region30: #{aff_pallas.1} parent=27 // pred_check_branch
          %227 = sbr.rel (%p225) target = $region32
        $region31: #{aff_pallas.1} parent=27 // pred_region
          %s228 = sand.u32 %s36, 1
          %s229 = sand.u32 %s36, 1
          %s230 = smul.addr %s229, 32
          %s231 = scalar_lea.vmem [#allocation2], %s230
          %s232 = smul.addr %s19, 16
          %s233 = sadd.s32 %s20, %s232
          %s234 = smul.addr %s233, 4
          %s235 = scalar_lea.vmem %s0, %s234
          // Predicated region
          $region33: #{aff_pallas.1} parent=31 // pred_check
            _
          $region34: #{aff_pallas.1} parent=31 // pred_check_branch
            %237 = sbr.rel (0) target = $region36
          $region35: #{aff_pallas.1} parent=31 // pred_region
            // Predicated region
            $region37: #{aff_pallas.1} parent=35 // pred_check
              _
            $region38: #{aff_pallas.1} parent=35 // pred_check_branch
              %239 = sbr.rel target = $region40
            $region39: #{aff_pallas.1} parent=35 // pred_region
              // Predicated region
              $region52: #{aff_pallas.1} parent=39 // pred_check
                _
              $region53: #{aff_pallas.1} parent=39 // pred_check_branch
                %268 = sbr.rel (0) target = $region55
              $region54: #{aff_pallas.1} parent=39 // pred_region
                loop: start=0, step=1, limit=1
                $region56: #{aff_pallas.1} parent=54 // loop_pre_header
                  _
                $region57: #{aff_pallas.1} parent=54 // loop_header
                  %s270 = sphi 0, %s274
                  %p271 = scmp.ge.s32.totalorder %s270, 1
                  %s275 = sphi %s235, %s235
                  %s276 = sphi %s231, %s231
                $region58: #{aff_pallas.1} parent=54 // loop_header_branch
                  %273 = sbr.rel (%p271) target = $region62
                $region59: #{aff_pallas.1} parent=54 // loop_body
                  _
                $region60: #{aff_pallas.1} parent=54 // loop_footer
                  %s274 = sadd.s32 1, %s270
                $region61: #{aff_pallas.1} parent=54 // loop_footer_branch
                  %269 = sbr.rel target = $region57
                $region62: #{aff_pallas.1} parent=54 // loop_exit
                  _
                loop: start=0, step=1, limit=1
                $region63: #{aff_pallas.1} parent=54 // loop_pre_header
                  _
                $region64: #{aff_pallas.1} parent=54 // loop_header
                  %s279 = sphi 0, %s283
                  %p280 = scmp.ge.s32.totalorder %s279, 1
                  %s284 = sphi %s235, %s235
                  %s285 = sphi %s231, %s231
                $region65: #{aff_pallas.1} parent=54 // loop_header_branch
                  %282 = sbr.rel (%p280) target = $region69
                $region66: #{aff_pallas.1} parent=54 // loop_body
                  %v286 = vld [vmem:[%s284] sm:$0xf]
                  %287 = vst [vmem:[%s285] sm:$0xf] %v286
                  %v288 = vld [vmem:[%s284 + $0x8] sm:$0xf]
                  %289 = vst [vmem:[%s285 + $0x4] sm:$0xf] %v288
                  %v290 = vld [vmem:[%s284 + $0x10] sm:$0xf]
                  %291 = vst [vmem:[%s285 + $0x8] sm:$0xf] %v290
                  %v292 = vld [vmem:[%s284 + $0x18] sm:$0xf]
                  %293 = vst [vmem:[%s285 + $0xc] sm:$0xf] %v292
                  %v294 = vld [vmem:[%s284 + $0x20] sm:$0xf]
                  %295 = vst [vmem:[%s285 + $0x10] sm:$0xf] %v294
                  %v296 = vld [vmem:[%s284 + $0x28] sm:$0xf]
                  %297 = vst [vmem:[%s285 + $0x14] sm:$0xf] %v296
                  %v298 = vld [vmem:[%s284 + $0x30] sm:$0xf]
                  %299 = vst [vmem:[%s285 + $0x18] sm:$0xf] %v298
                  %v300 = vld [vmem:[%s284 + $0x38] sm:$0xf]
                  %301 = vst [vmem:[%s285 + $0x1c] sm:$0xf] %v300
                $region67: #{aff_pallas.1} parent=54 // loop_footer
                  %s283 = sadd.s32 1, %s279
                $region68: #{aff_pallas.1} parent=54 // loop_footer_branch
                  %278 = sbr.rel target = $region64
                $region69: #{aff_pallas.1} parent=54 // loop_exit
                  _
              $region55: #{aff_pallas.1} parent=39 // pred_fallthru
                _
            $region40: #{aff_pallas.1} parent=35 // pred_fallthru
              _
            // Predicated region
            $region41: #{aff_pallas.1} parent=35 // pred_check
              _
            $region42: #{aff_pallas.1} parent=35 // pred_check_branch
              %241 = sbr.rel (0) target = $region44
            $region43: #{aff_pallas.1} parent=35 // pred_region
              loop: start=0, step=1, limit=1
              $region45: #{aff_pallas.1} parent=43 // loop_pre_header
                _
              $region46: #{aff_pallas.1} parent=43 // loop_header
                %s244 = sphi 0, %s248
                %p245 = scmp.ge.s32.totalorder %s244, 1
                %s249 = sphi %s235, %s235
                %s250 = sphi %s231, %s231
              $region47: #{aff_pallas.1} parent=43 // loop_header_branch
                %247 = sbr.rel (%p245) target = $region51
              $region48: #{aff_pallas.1} parent=43 // loop_body
                %v251 = vld [vmem:[%s249] sm:$0xf]
                %252 = vst [vmem:[%s250] sm:$0xf] %v251
                %v253 = vld [vmem:[%s249 + $0x8] sm:$0xf]
                %254 = vst [vmem:[%s250 + $0x4] sm:$0xf] %v253
                %v255 = vld [vmem:[%s249 + $0x10] sm:$0xf]
                %256 = vst [vmem:[%s250 + $0x8] sm:$0xf] %v255
                %v257 = vld [vmem:[%s249 + $0x18] sm:$0xf]
                %258 = vst [vmem:[%s250 + $0xc] sm:$0xf] %v257
                %v259 = vld [vmem:[%s249 + $0x20] sm:$0xf]
                %260 = vst [vmem:[%s250 + $0x10] sm:$0xf] %v259
                %v261 = vld [vmem:[%s249 + $0x28] sm:$0xf]
                %262 = vst [vmem:[%s250 + $0x14] sm:$0xf] %v261
                %v263 = vld [vmem:[%s249 + $0x30] sm:$0xf]
                %264 = vst [vmem:[%s250 + $0x18] sm:$0xf] %v263
                %v265 = vld [vmem:[%s249 + $0x38] sm:$0xf]
                %266 = vst [vmem:[%s250 + $0x1c] sm:$0xf] %v265
              $region49: #{aff_pallas.1} parent=43 // loop_footer
                %s248 = sadd.s32 1, %s244
              $region50: #{aff_pallas.1} parent=43 // loop_footer_branch
                %243 = sbr.rel target = $region46
              $region51: #{aff_pallas.1} parent=43 // loop_exit
                _
            $region44: #{aff_pallas.1} parent=35 // pred_fallthru
              _
          $region36: #{aff_pallas.1} parent=31 // pred_fallthru
            _
          %302 = vnop
        $region32: #{aff_pallas.1} parent=27 // pred_fallthru
          _
        // Predicated region
        $region70: #{aff_pallas.1} parent=27 // pred_check
          %p303 = pneg %p74
        $region71: #{aff_pallas.1} parent=27 // pred_check_branch
          %305 = sbr.rel (%p303) target = $region73
        $region72: #{aff_pallas.1} parent=27 // pred_region
          %s306 = sand.u32 %s64, 1
          %s307 = sand.u32 %s64, 1
          %s308 = smul.addr %s307, 32
          %s309 = scalar_lea.vmem [#allocation3], %s308
          %s310 = smul.addr %s19, 16
          %s311 = sadd.s32 %s20, %s310
          %s312 = smul.addr %s311, 4
          %s313 = scalar_lea.vmem %s1, %s312
          // Predicated region
          $region74: #{aff_pallas.1} parent=72 // pred_check
            _
          $region75: #{aff_pallas.1} parent=72 // pred_check_branch
            %315 = sbr.rel (0) target = $region77
          $region76: #{aff_pallas.1} parent=72 // pred_region
            // Predicated region
            $region78: #{aff_pallas.1} parent=76 // pred_check
              _
            $region79: #{aff_pallas.1} parent=76 // pred_check_branch
              %317 = sbr.rel target = $region81
            $region80: #{aff_pallas.1} parent=76 // pred_region
              // Predicated region
              $region93: #{aff_pallas.1} parent=80 // pred_check
                _
              $region94: #{aff_pallas.1} parent=80 // pred_check_branch
                %346 = sbr.rel (0) target = $region96
              $region95: #{aff_pallas.1} parent=80 // pred_region
                loop: start=0, step=1, limit=1
                $region97: #{aff_pallas.1} parent=95 // loop_pre_header
                  _
                $region98: #{aff_pallas.1} parent=95 // loop_header
                  %s348 = sphi 0, %s352
                  %p349 = scmp.ge.s32.totalorder %s348, 1
                  %s353 = sphi %s313, %s313
                  %s354 = sphi %s309, %s309
                $region99: #{aff_pallas.1} parent=95 // loop_header_branch
                  %351 = sbr.rel (%p349) target = $region103
                $region100: #{aff_pallas.1} parent=95 // loop_body
                  _
                $region101: #{aff_pallas.1} parent=95 // loop_footer
                  %s352 = sadd.s32 1, %s348
                $region102: #{aff_pallas.1} parent=95 // loop_footer_branch
                  %347 = sbr.rel target = $region98
                $region103: #{aff_pallas.1} parent=95 // loop_exit
                  _
                loop: start=0, step=1, limit=1
                $region104: #{aff_pallas.1} parent=95 // loop_pre_header
                  _
                $region105: #{aff_pallas.1} parent=95 // loop_header
                  %s357 = sphi 0, %s361
                  %p358 = scmp.ge.s32.totalorder %s357, 1
                  %s362 = sphi %s313, %s313
                  %s363 = sphi %s309, %s309
                $region106: #{aff_pallas.1} parent=95 // loop_header_branch
                  %360 = sbr.rel (%p358) target = $region110
                $region107: #{aff_pallas.1} parent=95 // loop_body
                  %v364 = vld [vmem:[%s362] sm:$0xf]
                  %365 = vst [vmem:[%s363] sm:$0xf] %v364
                  %v366 = vld [vmem:[%s362 + $0x8] sm:$0xf]
                  %367 = vst [vmem:[%s363 + $0x4] sm:$0xf] %v366
                  %v368 = vld [vmem:[%s362 + $0x10] sm:$0xf]
                  %369 = vst [vmem:[%s363 + $0x8] sm:$0xf] %v368
                  %v370 = vld [vmem:[%s362 + $0x18] sm:$0xf]
                  %371 = vst [vmem:[%s363 + $0xc] sm:$0xf] %v370
                  %v372 = vld [vmem:[%s362 + $0x20] sm:$0xf]
                  %373 = vst [vmem:[%s363 + $0x10] sm:$0xf] %v372
                  %v374 = vld [vmem:[%s362 + $0x28] sm:$0xf]
                  %375 = vst [vmem:[%s363 + $0x14] sm:$0xf] %v374
                  %v376 = vld [vmem:[%s362 + $0x30] sm:$0xf]
                  %377 = vst [vmem:[%s363 + $0x18] sm:$0xf] %v376
                  %v378 = vld [vmem:[%s362 + $0x38] sm:$0xf]
                  %379 = vst [vmem:[%s363 + $0x1c] sm:$0xf] %v378
                $region108: #{aff_pallas.1} parent=95 // loop_footer
                  %s361 = sadd.s32 1, %s357
                $region109: #{aff_pallas.1} parent=95 // loop_footer_branch
                  %356 = sbr.rel target = $region105
                $region110: #{aff_pallas.1} parent=95 // loop_exit
                  _
              $region96: #{aff_pallas.1} parent=80 // pred_fallthru
                _
            $region81: #{aff_pallas.1} parent=76 // pred_fallthru
              _
            // Predicated region
            $region82: #{aff_pallas.1} parent=76 // pred_check
              _
            $region83: #{aff_pallas.1} parent=76 // pred_check_branch
              %319 = sbr.rel (0) target = $region85
            $region84: #{aff_pallas.1} parent=76 // pred_region
              loop: start=0, step=1, limit=1
              $region86: #{aff_pallas.1} parent=84 // loop_pre_header
                _
              $region87: #{aff_pallas.1} parent=84 // loop_header
                %s322 = sphi 0, %s326
                %p323 = scmp.ge.s32.totalorder %s322, 1
                %s327 = sphi %s313, %s313
                %s328 = sphi %s309, %s309
              $region88: #{aff_pallas.1} parent=84 // loop_header_branch
                %325 = sbr.rel (%p323) target = $region92
              $region89: #{aff_pallas.1} parent=84 // loop_body
                %v329 = vld [vmem:[%s327] sm:$0xf]
                %330 = vst [vmem:[%s328] sm:$0xf] %v329
                %v331 = vld [vmem:[%s327 + $0x8] sm:$0xf]
                %332 = vst [vmem:[%s328 + $0x4] sm:$0xf] %v331
                %v333 = vld [vmem:[%s327 + $0x10] sm:$0xf]
                %334 = vst [vmem:[%s328 + $0x8] sm:$0xf] %v333
                %v335 = vld [vmem:[%s327 + $0x18] sm:$0xf]
                %336 = vst [vmem:[%s328 + $0xc] sm:$0xf] %v335
                %v337 = vld [vmem:[%s327 + $0x20] sm:$0xf]
                %338 = vst [vmem:[%s328 + $0x10] sm:$0xf] %v337
                %v339 = vld [vmem:[%s327 + $0x28] sm:$0xf]
                %340 = vst [vmem:[%s328 + $0x14] sm:$0xf] %v339
                %v341 = vld [vmem:[%s327 + $0x30] sm:$0xf]
                %342 = vst [vmem:[%s328 + $0x18] sm:$0xf] %v341
                %v343 = vld [vmem:[%s327 + $0x38] sm:$0xf]
                %344 = vst [vmem:[%s328 + $0x1c] sm:$0xf] %v343
              $region90: #{aff_pallas.1} parent=84 // loop_footer
                %s326 = sadd.s32 1, %s322
              $region91: #{aff_pallas.1} parent=84 // loop_footer_branch
                %321 = sbr.rel target = $region87
              $region92: #{aff_pallas.1} parent=84 // loop_exit
                _
            $region85: #{aff_pallas.1} parent=76 // pred_fallthru
              _
          $region77: #{aff_pallas.1} parent=72 // pred_fallthru
            _
          %380 = vnop
        $region73: #{aff_pallas.1} parent=27 // pred_fallthru
          _
        // Predicated region
        $region111: #{aff_pallas.1} parent=27 // pred_check
          %p381 = pneg %p100
        $region112: #{aff_pallas.1} parent=27 // pred_check_branch
          %383 = sbr.rel (%p381) target = $region114
        $region113: #{aff_pallas.1} parent=27 // pred_region
          %p384 = scmp.lt.s32.totalorder %s19, 1
          %s385 = scalar_select %p384, %s19, 1
          %s386 = smul.addr %s385, 8
          %s387 = smul.addr %s386, 8
          %s388 = scalar_lea.vmem %s2, %s387
        $region114: #{aff_pallas.1} parent=27 // pred_fallthru
          _
      $region28: #{aff_pallas.1} parent=5 // pred_fallthru
        _
      %p389 = scmp.le.s32.totalorder 1, %s12
      %p390 = scmp.lt.s32.totalorder %s12, 5
      %p391 = pnand %p389, %p390
      %p392 = pneg %p391
      // Predicated region
      $region115: #{aff_pallas.1} parent=5 // pred_check
        _
      $region116: #{aff_pallas.1} parent=5 // pred_check_branch
        %394 = sbr.rel (%p391) target = $region118
      $region117: #{aff_pallas.1} parent=5 // pred_region
        %s395 = ssub.s32 %s12, 1
        %s396 = sand.u32 %s39, 1
        %s397 = sand.u32 %s39, 1
        %s398 = smul.addr %s397, 32
        %s399 = scalar_lea.vmem [#allocation2], %s398
        // Predicated region
        $region119: #{aff_pallas.1} parent=117 // pred_check
          %p400 = pneg %p52
        $region120: #{aff_pallas.1} parent=117 // pred_check_branch
          %402 = sbr.rel (%p400) target = $region122
        $region121: #{aff_pallas.1} parent=117 // pred_region
          _
        $region122: #{aff_pallas.1} parent=117 // pred_fallthru
          _
        %s403 = sand.u32 %s67, 1
        %s404 = sand.u32 %s67, 1
        %s405 = smul.addr %s404, 32
        %s406 = scalar_lea.vmem [#allocation3], %s405
        // Predicated region
        $region123: #{aff_pallas.1} parent=117 // pred_check
          %p407 = pneg %p80
        $region124: #{aff_pallas.1} parent=117 // pred_check_branch
          %409 = sbr.rel (%p407) target = $region126
        $region125: #{aff_pallas.1} parent=117 // pred_region
          _
        $region126: #{aff_pallas.1} parent=117 // pred_fallthru
          _
        %s410 = sand.u32 %s39, 1
        %s411 = sand.u32 %s39, 1
        %s412 = smul.addr %s411, 32
        %s413 = scalar_lea.vmem [#allocation2], %s412
        %p414 = pneg %p52
        %p415 = pneg %p49
        %s416 = sand.u32 %s67, 1
        %s417 = sand.u32 %s67, 1
        %s418 = smul.addr %s417, 32
        %s419 = scalar_lea.vmem [#allocation3], %s418
        %p420 = pneg %p80
        %p421 = pneg %p77
        %p422 = scmp.lt.s32.totalorder %s21, 1
        %s423 = scalar_select %p422, %s21, 1
        %s424 = smul.addr %s423, 8
        %s425 = smul.addr %s424, 8
        %s426 = scalar_lea.vmem %s2, %s425
        %p427 = pneg %p106
        %p428 = pneg %p103
        %p429 = pneg %p127
        %p430 = pneg %p124
        %p431 = pneg %p148
        %p432 = pneg %p145
        %p433 = pneg %p169
        %p434 = pneg %p166
        %p435 = pneg %p197
        %p436 = pneg %p194
        %s437 = sand.u32 %s184, 1
        %s438 = sand.u32 %s184, 1
        %s439 = smul.addr %s438, 32
        %s440 = scalar_lea.vmem [#allocation4], %s439
        %p441 = scmp.lt.s32.totalorder %s21, 1
        %s442 = scalar_select %p441, %s21, 1
        %s443 = smul.addr %s442, 8
        %s444 = smul.addr %s443, 8
        %s445 = scalar_lea.vmem %s2, %s444
        %v447 = vld [vmem:[%s399] sm:$0xf]
        %v448 = vld [vmem:[%s399 + $0x4] sm:$0xf]
        %v449 = vld [vmem:[%s399 + $0x8] sm:$0xf]
        %v450 = vld [vmem:[%s399 + $0xc] sm:$0xf]
        %v451 = vld [vmem:[%s399 + $0x10] sm:$0xf]
        %v452 = vld [vmem:[%s399 + $0x14] sm:$0xf]
        %v453 = vld [vmem:[%s399 + $0x18] sm:$0xf]
        %v454 = vld [vmem:[%s399 + $0x1c] sm:$0xf]
        %v455 = vunpack.c.l.bf16 %v447
        %v456 = vunpack.c.l.bf16 %v448
        %v457 = vunpack.c.l.bf16 %v449
        %v458 = vunpack.c.l.bf16 %v450
        %v459 = vunpack.c.l.bf16 %v451
        %v460 = vunpack.c.l.bf16 %v452
        %v461 = vunpack.c.l.bf16 %v453
        %v462 = vunpack.c.l.bf16 %v454
        %v463 = vld [vmem:[%s406] sm:$0xf]
        %v464 = vld [vmem:[%s406 + $0x4] sm:$0xf]
        %v465 = vld [vmem:[%s406 + $0x8] sm:$0xf]
        %v466 = vld [vmem:[%s406 + $0xc] sm:$0xf]
        %v467 = vld [vmem:[%s406 + $0x10] sm:$0xf]
        %v468 = vld [vmem:[%s406 + $0x14] sm:$0xf]
        %v469 = vld [vmem:[%s406 + $0x18] sm:$0xf]
        %v470 = vld [vmem:[%s406 + $0x1c] sm:$0xf]
        %v471 = vunpack.c.l.bf16 %v463
        %v472 = vunpack.c.l.bf16 %v464
        %v473 = vunpack.c.l.bf16 %v465
        %v474 = vunpack.c.l.bf16 %v466
        %v475 = vunpack.c.l.bf16 %v467
        %v476 = vunpack.c.l.bf16 %v468
        %v477 = vunpack.c.l.bf16 %v469
        %v478 = vunpack.c.l.bf16 %v470
        %v479 = vadd.f32 %v455, %v471
        %v480 = vadd.f32 %v456, %v472
        %v481 = vadd.f32 %v457, %v473
        %v482 = vadd.f32 %v458, %v474
        %v483 = vadd.f32 %v459, %v475
        %v484 = vadd.f32 %v460, %v476
        %v485 = vadd.f32 %v461, %v477
        %v486 = vadd.f32 %v462, %v478
        %v487 = vpack.c.bf16 %v480, %v479
        %v488 = vpack.c.bf16 %v482, %v481
        %v489 = vpack.c.bf16 %v484, %v483
        %v490 = vpack.c.bf16 %v486, %v485
        %v491 = vld [vmem:[%s3] sm:$0xf]
        %v492 = vld [vmem:[%s3 + $0x4] sm:$0xf]
        %v493 = vld [vmem:[%s4] sm:$0xff]
        %v494 = vld [vmem:[%s4 + $0x8] sm:$0xff]
        %496 = vset.pattern.permute.xlu0 0
        %497 = vperm.xlu0 %496, %v493
        %v498 = vpop.permute.xlu0 %497
        %501 = vset.pattern.permute.xlu0 0
        %502 = vperm.xlu0 %501, %v494
        %v503 = vpop.permute.xlu0 %502
        %v507 = vunpack.c.l.b16 %v491
        %v508 = vunpack.c.l.b16 %v492
        %v509 = vpack.c.b16 %v508, %v507
        %vm510 = vcmask 523264
        %v512 = vsel %vm510, %v509, 0
        %514 = vmatprep.subr.bf16.mxu0 0
        %515 = vmatpush1.bf16.msra.mxu0 %v487
        %516 = vmatprep.subr.bf16.mxu0 0
        %517 = vmatpush1.bf16.msra.mxu0 %v488
        %518 = vmatprep.subr.bf16.mxu0 0
        %519 = vmatpush1.bf16.msra.mxu0 %v489
        %520 = vmatprep.subr.bf16.mxu0 0
        %521 = vmatpush1.bf16.msra.mxu0 %v490
        %522 = vmatprep.subr.bf16.mxu0 0
        %523 = vmatpush1.bf16.msra.mxu0 0
        %524 = vmatprep.subr.bf16.mxu0 0
        %525 = vmatpush1.bf16.msra.mxu0 0
        %526 = vmatprep.subr.bf16.mxu0 0
        %527 = vmatpush1.bf16.msra.mxu0 0
        %528 = vmatprep.subr.bf16.mxu0 0
        %529 = vmatpush1.bf16.msra.mxu0 0
        %530 = vmatprep.subr.bf16.mxu0 0
        %531 = vmatpush1.bf16.msra.mxu0 0
        %532 = vmatprep.subr.bf16.mxu0 0
        %533 = vmatpush1.bf16.msra.mxu0 0
        %534 = vmatprep.subr.bf16.mxu0 0
        %535 = vmatpush1.bf16.msra.mxu0 0
        %536 = vmatprep.subr.bf16.mxu0 0
        %537 = vmatpush1.bf16.msra.mxu0 0
        %538 = vmatprep.subr.bf16.mxu0 0
        %539 = vmatpush1.bf16.msra.mxu0 0
        %540 = vmatprep.subr.bf16.mxu0 0
        %541 = vmatpush1.bf16.msra.mxu0 0
        %542 = vmatprep.subr.bf16.mxu0 0
        %543 = vmatpush1.bf16.msra.mxu0 0
        %544 = vmatprep.subr.bf16.mxu0 0
        %545 = vmatpush1.bf16.msra.mxu0 0
        %546 = vmatprep.mubr.bf16.mxu0 0
        %547 = vmatmul.mubr.bf16.gmra.mrb[0].mxu0 %v512
        %v548 = vpop.f32.mrb[0].mxu0
        %v549 = vadd.f32 %v498, %v548
        %v550 = vpop.f32.mrb[0].mxu0
        %v551 = vpop.f32.mrb[0].mxu0
        %v552 = vadd.f32 %v503, %v551
        %v553 = vpop.f32.mrb[0].mxu0
        %554 = vdwg.mxu0
        %v555 = vmax.f32 %v549, 0.0
        %v556 = vmax.f32 %v552, 0.0
        %v557 = vld [vmem:[%s5] sm:$0xf]
        %v558 = vld [vmem:[%s5 + $0x4] sm:$0xf]
        %v559 = vld [vmem:[%s5 + $0x8] sm:$0xf]
        %v560 = vld [vmem:[%s5 + $0xc] sm:$0xf]
        %v561 = vld [vmem:[%s5 + $0x10] sm:$0xf]
        %v562 = vld [vmem:[%s5 + $0x14] sm:$0xf]
        %v563 = vld [vmem:[%s5 + $0x18] sm:$0xf]
        %v564 = vld [vmem:[%s5 + $0x1c] sm:$0xf]
        %v565 = vpack.c.bf16 %v556, %v555
        %v566 = vld [vmem:[%s445] sm:$0xff]
        %v567 = vld [vmem:[%s445 + $0x8] sm:$0xff]
        %v568 = vld [vmem:[%s445 + $0x10] sm:$0xff]
        %v569 = vld [vmem:[%s445 + $0x18] sm:$0xff]
        %v570 = vld [vmem:[%s445 + $0x20] sm:$0xff]
        %v571 = vld [vmem:[%s445 + $0x28] sm:$0xff]
        %v572 = vld [vmem:[%s445 + $0x30] sm:$0xff]
        %v573 = vld [vmem:[%s445 + $0x38] sm:$0xff]
        %575 = vset.pattern.permute.xlu0 0
        %576 = vperm.xlu0 %575, %v566
        %v577 = vpop.permute.xlu0 %576
        %580 = vset.pattern.permute.xlu0 0
        %581 = vperm.xlu0 %580, %v567
        %v582 = vpop.permute.xlu0 %581
        %585 = vset.pattern.permute.xlu0 0
        %586 = vperm.xlu0 %585, %v568
        %v587 = vpop.permute.xlu0 %586
        %590 = vset.pattern.permute.xlu0 0
        %591 = vperm.xlu0 %590, %v569
        %v592 = vpop.permute.xlu0 %591
        %595 = vset.pattern.permute.xlu0 0
        %596 = vperm.xlu0 %595, %v570
        %v597 = vpop.permute.xlu0 %596
        %600 = vset.pattern.permute.xlu0 0
        %601 = vperm.xlu0 %600, %v571
        %v602 = vpop.permute.xlu0 %601
        %605 = vset.pattern.permute.xlu0 0
        %606 = vperm.xlu0 %605, %v572
        %v607 = vpop.permute.xlu0 %606
        %610 = vset.pattern.permute.xlu0 0
        %611 = vperm.xlu0 %610, %v573
        %v612 = vpop.permute.xlu0 %611
        %v622 = vunpack.c.l.b16 %v557
        %v623 = vunpack.c.l.b16 %v558
        %v624 = vunpack.c.l.b16 %v559
        %v625 = vunpack.c.l.b16 %v560
        %v626 = vunpack.c.l.b16 %v561
        %v627 = vunpack.c.l.b16 %v562
        %v628 = vunpack.c.l.b16 %v563
        %v629 = vunpack.c.l.b16 %v564
        %v630 = vpack.c.b16 %v623, %v622
        %v631 = vpack.c.b16 %v625, %v624
        %v632 = vpack.c.b16 %v627, %v626
        %v633 = vpack.c.b16 %v629, %v628
        %vm634 = vcmask 130048
        %v636 = vsel %vm634, %v630, 0
        %v639 = vsel %vm634, %v631, 0
        %v642 = vsel %vm634, %v632, 0
        %v645 = vsel %vm634, %v633, 0
        %647 = vmatprep.subr.bf16.mxu0 0
        %648 = vmatpush1.bf16.msra.mxu0 %v565
        %649 = vmatprep.subr.bf16.mxu0 0
        %650 = vmatpush1.bf16.msra.mxu0 0
        %651 = vmatprep.subr.bf16.mxu0 0
        %652 = vmatpush1.bf16.msra.mxu0 0
        %653 = vmatprep.subr.bf16.mxu0 0
        %654 = vmatpush1.bf16.msra.mxu0 0
        %655 = vmatprep.subr.bf16.mxu0 0
        %656 = vmatpush1.bf16.msra.mxu0 0
        %657 = vmatprep.subr.bf16.mxu0 0
        %658 = vmatpush1.bf16.msra.mxu0 0
        %659 = vmatprep.subr.bf16.mxu0 0
        %660 = vmatpush1.bf16.msra.mxu0 0
        %661 = vmatprep.subr.bf16.mxu0 0
        %662 = vmatpush1.bf16.msra.mxu0 0
        %663 = vmatprep.subr.bf16.mxu0 0
        %664 = vmatpush1.bf16.msra.mxu0 0
        %665 = vmatprep.subr.bf16.mxu0 0
        %666 = vmatpush1.bf16.msra.mxu0 0
        %667 = vmatprep.subr.bf16.mxu0 0
        %668 = vmatpush1.bf16.msra.mxu0 0
        %669 = vmatprep.subr.bf16.mxu0 0
        %670 = vmatpush1.bf16.msra.mxu0 0
        %671 = vmatprep.subr.bf16.mxu0 0
        %672 = vmatpush1.bf16.msra.mxu0 0
        %673 = vmatprep.subr.bf16.mxu0 0
        %674 = vmatpush1.bf16.msra.mxu0 0
        %675 = vmatprep.subr.bf16.mxu0 0
        %676 = vmatpush1.bf16.msra.mxu0 0
        %677 = vmatprep.subr.bf16.mxu0 0
        %678 = vmatpush1.bf16.msra.mxu0 0
        %679 = vmatprep.mubr.bf16.mxu0 0
        %680 = vmatmul.mubr.bf16.gmra.mrb[0].mxu0 %v636
        %v681 = vpop.f32.mrb[0].mxu0
        %v682 = vadd.f32 %v577, %v681
        %v683 = vpop.f32.mrb[0].mxu0
        %v684 = vpop.f32.mrb[0].mxu0
        %v685 = vadd.f32 %v582, %v684
        %v686 = vpop.f32.mrb[0].mxu0
        %687 = vmatprep.mubr.bf16.mxu0 0
        %688 = vmatmul.mubr.bf16.gmra.mrb[0].mxu0 %v639
        %v689 = vpop.f32.mrb[0].mxu0
        %v690 = vadd.f32 %v587, %v689
        %v691 = vpop.f32.mrb[0].mxu0
        %v692 = vpop.f32.mrb[0].mxu0
        %v693 = vadd.f32 %v592, %v692
        %v694 = vpop.f32.mrb[0].mxu0
        %695 = vmatprep.mubr.bf16.mxu0 0
        %696 = vmatmul.mubr.bf16.gmra.mrb[0].mxu0 %v642
        %v697 = vpop.f32.mrb[0].mxu0
        %v698 = vadd.f32 %v597, %v697
        %v699 = vpop.f32.mrb[0].mxu0
        %v700 = vpop.f32.mrb[0].mxu0
        %v701 = vadd.f32 %v602, %v700
        %v702 = vpop.f32.mrb[0].mxu0
        %703 = vmatprep.mubr.bf16.mxu0 0
        %704 = vmatmul.mubr.bf16.gmra.mrb[0].mxu0 %v645
        %v705 = vpop.f32.mrb[0].mxu0
        %v706 = vadd.f32 %v607, %v705
        %v707 = vpop.f32.mrb[0].mxu0
        %v708 = vpop.f32.mrb[0].mxu0
        %v709 = vadd.f32 %v612, %v708
        %v710 = vpop.f32.mrb[0].mxu0
        %711 = vdwg.mxu0
        %v712 = vsub.f32 0.0, %v682
        %v713 = vsub.f32 0.0, %v685
        %v714 = vsub.f32 0.0, %v690
        %v715 = vsub.f32 0.0, %v693
        %v716 = vsub.f32 0.0, %v698
        %v717 = vsub.f32 0.0, %v701
        %v718 = vsub.f32 0.0, %v706
        %v719 = vsub.f32 0.0, %v709
        %v720 = vmul.f32 %v712, 1.442695
        %v721 = vpow.pop %v720
        %v722 = vmul.f32 %v713, 1.442695
        %v723 = vpow.pop %v722
        %v724 = vmul.f32 %v714, 1.442695
        %v725 = vpow.pop %v724
        %v726 = vmul.f32 %v715, 1.442695
        %v727 = vpow.pop %v726
        %v728 = vmul.f32 %v716, 1.442695
        %v729 = vpow.pop %v728
        %v730 = vmul.f32 %v717, 1.442695
        %v731 = vpow.pop %v730
        %v732 = vmul.f32 %v718, 1.442695
        %v733 = vpow.pop %v732
        %v734 = vmul.f32 %v719, 1.442695
        %v735 = vpow.pop %v734
        %v736 = vadd.f32 %v721, 1.0
        %v737 = vadd.f32 %v723, 1.0
        %v738 = vadd.f32 %v725, 1.0
        %v739 = vadd.f32 %v727, 1.0
        %v740 = vadd.f32 %v729, 1.0
        %v741 = vadd.f32 %v731, 1.0
        %v742 = vadd.f32 %v733, 1.0
        %v743 = vadd.f32 %v735, 1.0
        %v744 = vrcp.pop %v736
        %v745 = vrcp.pop %v737
        %v746 = vrcp.pop %v738
        %v747 = vrcp.pop %v739
        %v748 = vrcp.pop %v740
        %v749 = vrcp.pop %v741
        %v750 = vrcp.pop %v742
        %v751 = vrcp.pop %v743
        %v752 = vsub.f32 %v455, %v471
        %v753 = vsub.f32 %v456, %v472
        %v754 = vsub.f32 %v457, %v473
        %v755 = vsub.f32 %v458, %v474
        %v756 = vsub.f32 %v459, %v475
        %v757 = vsub.f32 %v460, %v476
        %v758 = vsub.f32 %v461, %v477
        %v759 = vsub.f32 %v462, %v478
        %v760 = vmul.f32 %v744, %v752
        %v761 = vmul.f32 %v745, %v753
        %v762 = vmul.f32 %v746, %v754
        %v763 = vmul.f32 %v747, %v755
        %v764 = vmul.f32 %v748, %v756
        %v765 = vmul.f32 %v749, %v757
        %v766 = vmul.f32 %v750, %v758
        %v767 = vmul.f32 %v751, %v759
        %v768 = vadd.f32 %v471, %v760
        %v769 = vadd.f32 %v472, %v761
        %v770 = vadd.f32 %v473, %v762
        %v771 = vadd.f32 %v474, %v763
        %v772 = vadd.f32 %v475, %v764
        %v773 = vadd.f32 %v476, %v765
        %v774 = vadd.f32 %v477, %v766
        %v775 = vadd.f32 %v478, %v767
        %v776 = vmul.f32 %v768, 2.0
        %v777 = vmul.f32 %v769, 2.0
        %v778 = vmul.f32 %v770, 2.0
        %v779 = vmul.f32 %v771, 2.0
        %v780 = vmul.f32 %v772, 2.0
        %v781 = vmul.f32 %v773, 2.0
        %v782 = vmul.f32 %v774, 2.0
        %v783 = vmul.f32 %v775, 2.0
        %v784 = vpack.c.bf16 %v777, %v776
        %v785 = vpack.c.bf16 %v779, %v778
        %v786 = vpack.c.bf16 %v781, %v780
        %v787 = vpack.c.bf16 %v783, %v782
        %v792 = vunpack.c.l.b16 %v784
        %v793 = vunpack.c.h.b16 %v784
        %v794 = vunpack.c.l.b16 %v785
        %v795 = vunpack.c.h.b16 %v785
        %v796 = vunpack.c.l.b16 %v786
        %v797 = vunpack.c.h.b16 %v786
        %v798 = vunpack.c.l.b16 %v787
        %v799 = vunpack.c.h.b16 %v787
        %v800 = vpack.c.b16 %v792, %v792
        %v801 = vpack.c.b16 %v793, %v793
        %v802 = vpack.c.b16 %v794, %v794
        %v803 = vpack.c.b16 %v795, %v795
        %v804 = vpack.c.b16 %v796, %v796
        %v805 = vpack.c.b16 %v797, %v797
        %v806 = vpack.c.b16 %v798, %v798
        %v807 = vpack.c.b16 %v799, %v799
        %816 = vst [vmem:[%s440] sm:$0xf] %v800
        %817 = vst [vmem:[%s440 + $0x4] sm:$0xf] %v801
        %818 = vst [vmem:[%s440 + $0x8] sm:$0xf] %v802
        %819 = vst [vmem:[%s440 + $0xc] sm:$0xf] %v803
        %820 = vst [vmem:[%s440 + $0x10] sm:$0xf] %v804
        %821 = vst [vmem:[%s440 + $0x14] sm:$0xf] %v805
        %822 = vst [vmem:[%s440 + $0x18] sm:$0xf] %v806
        %823 = vst [vmem:[%s440 + $0x1c] sm:$0xf] %v807
        %s824 = sand.u32 %s184, 1
        %s825 = sand.u32 %s184, 1
        %s826 = smul.addr %s825, 32
        %s827 = scalar_lea.vmem [#allocation4], %s826
        // Predicated region
        $region127: #{aff_pallas.1} parent=117 // pred_check
          %p828 = pneg %p194
        $region128: #{aff_pallas.1} parent=117 // pred_check_branch
          %830 = sbr.rel (%p828) target = $region130
        $region129: #{aff_pallas.1} parent=117 // pred_region
          %s831 = smul.addr %s21, 16
          %s832 = sadd.s32 %s22, %s831
          %s833 = smul.addr %s832, 4
          %s834 = scalar_lea.vmem %s6, %s833
          // Predicated region
          $region131: #{aff_pallas.1} parent=129 // pred_check
            _
          $region132: #{aff_pallas.1} parent=129 // pred_check_branch
            %836 = sbr.rel (0) target = $region134
          $region133: #{aff_pallas.1} parent=129 // pred_region
            // Predicated region
            $region135: #{aff_pallas.1} parent=133 // pred_check
              _
            $region136: #{aff_pallas.1} parent=133 // pred_check_branch
              %838 = sbr.rel target = $region138
            $region137: #{aff_pallas.1} parent=133 // pred_region
              // Predicated region
              $region150: #{aff_pallas.1} parent=137 // pred_check
                _
              $region151: #{aff_pallas.1} parent=137 // pred_check_branch
                %867 = sbr.rel (0) target = $region153
              $region152: #{aff_pallas.1} parent=137 // pred_region
                loop: start=0, step=1, limit=1
                $region154: #{aff_pallas.1} parent=152 // loop_pre_header
                  _
                $region155: #{aff_pallas.1} parent=152 // loop_header
                  %s869 = sphi 0, %s873
                  %p870 = scmp.ge.s32.totalorder %s869, 1
                  %s874 = sphi %s827, %s827
                  %s875 = sphi %s834, %s834
                $region156: #{aff_pallas.1} parent=152 // loop_header_branch
                  %872 = sbr.rel (%p870) target = $region160
                $region157: #{aff_pallas.1} parent=152 // loop_body
                  _
                $region158: #{aff_pallas.1} parent=152 // loop_footer
                  %s873 = sadd.s32 1, %s869
                $region159: #{aff_pallas.1} parent=152 // loop_footer_branch
                  %868 = sbr.rel target = $region155
                $region160: #{aff_pallas.1} parent=152 // loop_exit
                  _
                loop: start=0, step=1, limit=1
                $region161: #{aff_pallas.1} parent=152 // loop_pre_header
                  _
                $region162: #{aff_pallas.1} parent=152 // loop_header
                  %s878 = sphi 0, %s882
                  %p879 = scmp.ge.s32.totalorder %s878, 1
                  %s883 = sphi %s827, %s827
                  %s884 = sphi %s834, %s834
                $region163: #{aff_pallas.1} parent=152 // loop_header_branch
                  %881 = sbr.rel (%p879) target = $region167
                $region164: #{aff_pallas.1} parent=152 // loop_body
                  %v885 = vld [vmem:[%s883] sm:$0xf]
                  %886 = vst [vmem:[%s884] sm:$0xf] %v885
                  %v887 = vld [vmem:[%s883 + $0x4] sm:$0xf]
                  %888 = vst [vmem:[%s884 + $0x8] sm:$0xf] %v887
                  %v889 = vld [vmem:[%s883 + $0x8] sm:$0xf]
                  %890 = vst [vmem:[%s884 + $0x10] sm:$0xf] %v889
                  %v891 = vld [vmem:[%s883 + $0xc] sm:$0xf]
                  %892 = vst [vmem:[%s884 + $0x18] sm:$0xf] %v891
                  %v893 = vld [vmem:[%s883 + $0x10] sm:$0xf]
                  %894 = vst [vmem:[%s884 + $0x20] sm:$0xf] %v893
                  %v895 = vld [vmem:[%s883 + $0x14] sm:$0xf]
                  %896 = vst [vmem:[%s884 + $0x28] sm:$0xf] %v895
                  %v897 = vld [vmem:[%s883 + $0x18] sm:$0xf]
                  %898 = vst [vmem:[%s884 + $0x30] sm:$0xf] %v897
                  %v899 = vld [vmem:[%s883 + $0x1c] sm:$0xf]
                  %900 = vst [vmem:[%s884 + $0x38] sm:$0xf] %v899
                $region165: #{aff_pallas.1} parent=152 // loop_footer
                  %s882 = sadd.s32 1, %s878
                $region166: #{aff_pallas.1} parent=152 // loop_footer_branch
                  %877 = sbr.rel target = $region162
                $region167: #{aff_pallas.1} parent=152 // loop_exit
                  _
              $region153: #{aff_pallas.1} parent=137 // pred_fallthru
                _
            $region138: #{aff_pallas.1} parent=133 // pred_fallthru
              _
            // Predicated region
            $region139: #{aff_pallas.1} parent=133 // pred_check
              _
            $region140: #{aff_pallas.1} parent=133 // pred_check_branch
              %840 = sbr.rel (0) target = $region142
            $region141: #{aff_pallas.1} parent=133 // pred_region
              loop: start=0, step=1, limit=1
              $region143: #{aff_pallas.1} parent=141 // loop_pre_header
                _
              $region144: #{aff_pallas.1} parent=141 // loop_header
                %s843 = sphi 0, %s847
                %p844 = scmp.ge.s32.totalorder %s843, 1
                %s848 = sphi %s827, %s827
                %s849 = sphi %s834, %s834
              $region145: #{aff_pallas.1} parent=141 // loop_header_branch
                %846 = sbr.rel (%p844) target = $region149
              $region146: #{aff_pallas.1} parent=141 // loop_body
                %v850 = vld [vmem:[%s848] sm:$0xf]
                %851 = vst [vmem:[%s849] sm:$0xf] %v850
                %v852 = vld [vmem:[%s848 + $0x4] sm:$0xf]
                %853 = vst [vmem:[%s849 + $0x8] sm:$0xf] %v852
                %v854 = vld [vmem:[%s848 + $0x8] sm:$0xf]
                %855 = vst [vmem:[%s849 + $0x10] sm:$0xf] %v854
                %v856 = vld [vmem:[%s848 + $0xc] sm:$0xf]
                %857 = vst [vmem:[%s849 + $0x18] sm:$0xf] %v856
                %v858 = vld [vmem:[%s848 + $0x10] sm:$0xf]
                %859 = vst [vmem:[%s849 + $0x20] sm:$0xf] %v858
                %v860 = vld [vmem:[%s848 + $0x14] sm:$0xf]
                %861 = vst [vmem:[%s849 + $0x28] sm:$0xf] %v860
                %v862 = vld [vmem:[%s848 + $0x18] sm:$0xf]
                %863 = vst [vmem:[%s849 + $0x30] sm:$0xf] %v862
                %v864 = vld [vmem:[%s848 + $0x1c] sm:$0xf]
                %865 = vst [vmem:[%s849 + $0x38] sm:$0xf] %v864
              $region147: #{aff_pallas.1} parent=141 // loop_footer
                %s847 = sadd.s32 1, %s843
              $region148: #{aff_pallas.1} parent=141 // loop_footer_branch
                %842 = sbr.rel target = $region144
              $region149: #{aff_pallas.1} parent=141 // loop_exit
                _
            $region142: #{aff_pallas.1} parent=133 // pred_fallthru
              _
          $region134: #{aff_pallas.1} parent=129 // pred_fallthru
            _
          %901 = vnop
        $region130: #{aff_pallas.1} parent=117 // pred_fallthru
          _
      $region118: #{aff_pallas.1} parent=5 // pred_fallthru
        _
      %p902 = scmp.le.s32.totalorder 2, %s12
      // Predicated region
      $region168: #{aff_pallas.1} parent=5 // pred_check
        %p903 = pneg %p902
      $region169: #{aff_pallas.1} parent=5 // pred_check_branch
        %905 = sbr.rel (%p903) target = $region171
      $region170: #{aff_pallas.1} parent=5 // pred_region
        %s906 = ssub.s32 %s12, 2
        // Predicated region
        $region172: #{aff_pallas.1} parent=170 // pred_check
          %p907 = pneg %p200
        $region173: #{aff_pallas.1} parent=170 // pred_check_branch
          %909 = sbr.rel (%p907) target = $region175
        $region174: #{aff_pallas.1} parent=170 // pred_region
          %s910 = sand.u32 %s185, 1
          %s911 = sand.u32 %s185, 1
          %s912 = smul.addr %s911, 32
          %s913 = scalar_lea.vmem [#allocation4], %s912
        $region175: #{aff_pallas.1} parent=170 // pred_fallthru
          _
      $region171: #{aff_pallas.1} parent=5 // pred_fallthru
        _
    $region6: #{aff_pallas.1} parent=1 // loop_footer
      %s16 = sadd.s32 1, %s12
    $region7: #{aff_pallas.1} parent=1 // loop_footer_branch
      %11 = sbr.rel target = $region3
    $region8: #{aff_pallas.1} parent=1 // loop_exit
      _

</llo_original>
